<compile_context>
chip_gen: v5e
topology: v5e:2x2
jax: 0.10.0
libtpu: 0.0.40
codegen_flags: <defaults>
</compile_context>

<pallas_src>
import jax
import jax.numpy as jnp
from jax.experimental import pallas as pl
from jax.experimental.pallas import tpu as pltpu

LANE = 128


def _round_up(n, m):
    return ((n + m - 1) // m) * m


def decoder_kernel(x_ref, w1_ref, b1_ref, w2_ref, b2_ref, o_ref):
    x = x_ref[...]                                              # (block_b, D_in), compute dtype
    # Layer 1: MXU matmul, f32 accumulation, f32 bias, ReLU on the VPU.
    h = jnp.dot(x, w1_ref[...], preferred_element_type=jnp.float32) + b1_ref[...]
    h = jnp.maximum(h, 0.0).astype(x.dtype)                     # back to operand dtype for MXU #2
    # Layer 2 + sigmoid; sigmoid math stays in f32 (works on v5e: no bf16 EUP).
    y = jnp.dot(h, w2_ref[...], preferred_element_type=jnp.float32) + b2_ref[...]
    o_ref[...] = jax.nn.sigmoid(y).astype(o_ref.dtype)


def prepare_decoder_params(w1, b1, w2, b2, compute_dtype=jnp.float32):
    """One-time weight prep (hoisted out of the per-call path).

    w1: (D_in, H), b1: (H,)/(1,H), w2: (H, D_out), b2: (D_out,)/(1,D_out).
    Only H is zero-padded to a lane multiple (inert: relu(0+0)=0 meets zero W2
    rows). D_in and D_out are left unpadded. Biases stay f32.
    Pass compute_dtype=jnp.bfloat16 on v5e/v6e/v7x for 2x HBM/MXU throughput.
    """
    compute_dtype = jnp.dtype(compute_dtype)
    D_in, H = w1.shape
    D_out = w2.shape[1]
    H_p = _round_up(H, LANE)
    w1p = jnp.pad(w1.astype(compute_dtype), ((0, 0), (0, H_p - H)))
    w2p = jnp.pad(w2.astype(compute_dtype), ((0, H_p - H), (0, 0)))
    b1p = jnp.pad(b1.astype(jnp.float32).reshape(1, H), ((0, 0), (0, H_p - H)))
    b2p = b2.astype(jnp.float32).reshape(1, D_out)
    return (w1p, b1p, w2p, b2p)


def decoder_forward(x, params, *, block_b=None):
    """x: (B, D_in); params: output of prepare_decoder_params()."""
    w1p, b1p, w2p, b2p = params
    compute_dtype = w1p.dtype
    out_dtype = x.dtype

    B, D_in = x.shape
    assert w1p.shape[0] == D_in, "x feature dim must match W1 rows"
    H_p = w1p.shape[1]
    D_out = w2p.shape[1]

    sub = 16 if compute_dtype == jnp.bfloat16 else 8            # sublane packing

    if block_b is None:
        # >= 2 grid steps when possible (v7x dual-TC), tiles capped at 2048 rows.
        block_b = max(sub, min(2048, _round_up(pl.cdiv(B, 2), sub)))
    else:
        block_b = max(sub, _round_up(block_b, sub))
    B_p = _round_up(B, block_b)

    xc = x.astype(compute_dtype)
    if B_p != B:
        # Batch-row pad only when needed (inert; stripped at the end).
        xc = jnp.pad(xc, ((0, B_p - B), (0, 0)))

    grid = (B_p // block_b,)

    # Tight VMEM budget: ~2x actual footprint, a few MiB (v7x has 64 MiB).
    itemsize = jnp.dtype(compute_dtype).itemsize
    out_itemsize = jnp.dtype(out_dtype).itemsize
    w_bytes = 2 * ((D_in * H_p + H_p * D_out) * itemsize + (H_p + D_out) * 4)
    io_bytes = 2 * block_b * D_in * itemsize + 2 * block_b * D_out * out_itemsize
    tmp_bytes = 2 * block_b * (H_p + D_out) * 4                 # f32 intermediates headroom
    vmem_limit = int(min(max(2 * (w_bytes + io_bytes + tmp_bytes), 8 * 2**20), 32 * 2**20))

    cost = pl.CostEstimate(
        flops=2 * B_p * (D_in * H_p + H_p * D_out),
        transcendentals=B_p * D_out,                            # sigmoid
        bytes_accessed=int(B_p * D_in * itemsize
                           + (D_in * H_p + H_p * D_out) * itemsize
                           + (H_p + D_out) * 4
                           + B_p * D_out * out_itemsize),
    )

    out = pl.pallas_call(
        decoder_kernel,
        out_shape=jax.ShapeDtypeStruct((B_p, D_out), out_dtype),
        grid_spec=pltpu.PrefetchScalarGridSpec(
            num_scalar_prefetch=0,
            grid=grid,
            in_specs=[
                pl.BlockSpec((block_b, D_in), lambda i: (i, 0)),   # x tile, unpadded features
                pl.BlockSpec((D_in, H_p), lambda i: (0, 0)),       # W1 (resident)
                pl.BlockSpec((1, H_p), lambda i: (0, 0)),          # b1 (f32, resident)
                pl.BlockSpec((H_p, D_out), lambda i: (0, 0)),      # W2 (resident)
                pl.BlockSpec((1, D_out), lambda i: (0, 0)),        # b2 (f32, resident)
            ],
            out_specs=pl.BlockSpec((block_b, D_out), lambda i: (i, 0)),  # narrow output, no pad
        ),
        compiler_params=pltpu.CompilerParams(
            dimension_semantics=("parallel",),        # batch tiles shard across TCs (v7x)
            vmem_limit_bytes=vmem_limit,
        ),
        cost_estimate=cost,
    )(xc, w1p, b1p, w2p, b2p)

    return out if B_p == B else out[:B]


def init_decoder_params(key, D_in, H, D_out, dtype=jnp.float32):
    """Mimics nn.Linear init; weights pre-transposed to (in, out) so kernel does x @ W + b."""
    k1, k2, k3, k4 = jax.random.split(key, 4)
    lim1 = 1.0 / (D_in ** 0.5)
    lim2 = 1.0 / (H ** 0.5)
    w1 = jax.random.uniform(k1, (D_in, H), dtype, minval=-lim1, maxval=lim1)
    b1 = jax.random.uniform(k2, (1, H), dtype, minval=-lim1, maxval=lim1)
    w2 = jax.random.uniform(k3, (H, D_out), dtype, minval=-lim2, maxval=lim2)
    b2 = jax.random.uniform(k4, (1, D_out), dtype, minval=-lim2, maxval=lim2)
    return w1, b1, w2, b2


if __name__ == "__main__":
    # Small shapes consistent with Decoder(D_in, H, D_out). B=256 with the
    # default block_b=128 gives a 2-step grid (pipelining + v7x dual-core
    # sharding) with no batch padding and no post-kernel slicing at all.
    B, D_in, H, D_out = 256, 32, 64, 16

    key = jax.random.PRNGKey(0)
    kx, kp = jax.random.split(key)
    x = jax.random.normal(kx, (B, D_in), jnp.float32)
    w1, b1, w2, b2 = init_decoder_params(kp, D_in, H, D_out)

    ref = jax.nn.sigmoid(jnp.maximum(x @ w1 + b1, 0.0) @ w2 + b2)

    # f32 operands / f32 accumulation (matches the PyTorch module's math).
    params_f32 = prepare_decoder_params(w1, b1, w2, b2, compute_dtype=jnp.float32)
    out = jax.block_until_ready(decoder_forward(x, params_f32))
    assert out.shape == (B, D_out)
    assert jnp.allclose(out, ref, atol=2e-5, rtol=1e-4)

    # bf16 operands / f32 accumulation: recommended on v5e/v6e/v7x (halves the
    # dominant HBM bytes, native bf16 MXU rate); numerics held by f32 accum.
    params_bf16 = prepare_decoder_params(w1, b1, w2, b2, compute_dtype=jnp.bfloat16)
    out_bf16 = jax.block_until_ready(decoder_forward(x, params_bf16))
    assert out_bf16.shape == (B, D_out)
    assert jnp.allclose(out_bf16, ref, atol=5e-2)

    print("KERNEL_OK")
</pallas_src>

<mosaic_0001>
module attributes {stable_mosaic.version = 11 : i64} {
  func.func @decoder_kernel(%arg0: i32, %arg1: memref<128x32xf32, #tpu.memory_space<vmem>>, %arg2: memref<32x128xf32, #tpu.memory_space<vmem>>, %arg3: memref<1x128xf32, #tpu.memory_space<vmem>>, %arg4: memref<128x16xf32, #tpu.memory_space<vmem>>, %arg5: memref<1x16xf32, #tpu.memory_space<vmem>>, %arg6: memref<128x16xf32, #tpu.memory_space<vmem>>) attributes {dimension_semantics = [#tpu.dimension_semantics<parallel>], iteration_bounds = array<i64: 2>, scalar_prefetch = 0 : i64, scratch_operands = 0 : i64, tpu.core_type = #tpu.core_type<tc>, window_params = [{transform_indices = @transform_0, window_bounds = array<i64: 128, 32>}, {pipeline_mode = #tpu.pipeline_mode<synchronous>, transform_indices = @transform_1, window_bounds = array<i64: 32, 128>}, {pipeline_mode = #tpu.pipeline_mode<synchronous>, transform_indices = @transform_2, window_bounds = array<i64: 1, 128>}, {pipeline_mode = #tpu.pipeline_mode<synchronous>, transform_indices = @transform_3, window_bounds = array<i64: 128, 16>}, {pipeline_mode = #tpu.pipeline_mode<synchronous>, transform_indices = @transform_4, window_bounds = array<i64: 1, 16>}, {transform_indices = @transform_5, window_bounds = array<i64: 128, 16>}]} {
    %c0 = arith.constant 0 : index
    %c0_0 = arith.constant 0 : index
    %0 = vector.load %arg1[%c0, %c0_0] : memref<128x32xf32, #tpu.memory_space<vmem>>, vector<128x32xf32>
    %c0_1 = arith.constant 0 : index
    %c0_2 = arith.constant 0 : index
    %1 = vector.load %arg2[%c0_1, %c0_2] : memref<32x128xf32, #tpu.memory_space<vmem>>, vector<32x128xf32>
    %cst = arith.constant dense<0.000000e+00> : vector<128x128xf32>
    %2 = tpu.matmul %0, %1, %cst {dimension_numbers = #tpu.dot_dimension_numbers<[1], [0], [0], [1], [0, 0, 1, 1], [], []>} : vector<128x32xf32>, vector<32x128xf32>, vector<128x128xf32> -> vector<128x128xf32>
    %c0_3 = arith.constant 0 : index
    %c0_4 = arith.constant 0 : index
    %3 = vector.load %arg3[%c0_3, %c0_4] : memref<1x128xf32, #tpu.memory_space<vmem>>, vector<1x128xf32>
    %4 = vector.broadcast %3 : vector<1x128xf32> to vector<128x128xf32>
    %5 = arith.addf %2, %4 : vector<128x128xf32>
    %cst_5 = arith.constant 0.000000e+00 : f32
    %6 = vector.broadcast %cst_5 : f32 to vector<128x128xf32>
    %7 = arith.maximumf %5, %6 : vector<128x128xf32>
    %c0_6 = arith.constant 0 : index
    %c0_7 = arith.constant 0 : index
    %8 = vector.load %arg4[%c0_6, %c0_7] : memref<128x16xf32, #tpu.memory_space<vmem>>, vector<128x16xf32>
    %cst_8 = arith.constant dense<0.000000e+00> : vector<128x16xf32>
    %9 = tpu.matmul %7, %8, %cst_8 {dimension_numbers = #tpu.dot_dimension_numbers<[1], [0], [0], [1], [0, 0, 1, 1], [], []>} : vector<128x128xf32>, vector<128x16xf32>, vector<128x16xf32> -> vector<128x16xf32>
    %c0_9 = arith.constant 0 : index
    %c0_10 = arith.constant 0 : index
    %10 = vector.load %arg5[%c0_9, %c0_10] : memref<1x16xf32, #tpu.memory_space<vmem>>, vector<1x16xf32>
    %11 = vector.broadcast %10 : vector<1x16xf32> to vector<128x16xf32>
    %12 = arith.addf %9, %11 : vector<128x16xf32>
    %13 = arith.negf %12 : vector<128x16xf32>
    %14 = math.exp %13 : vector<128x16xf32>
    %cst_11 = arith.constant 1.000000e+00 : f32
    %15 = vector.broadcast %cst_11 : f32 to vector<128x16xf32>
    %16 = arith.addf %15, %14 : vector<128x16xf32>
    %17 = arith.divf %15, %16 : vector<128x16xf32>
    %c0_12 = arith.constant 0 : index
    %c0_13 = arith.constant 0 : index
    %18 = vector.load %arg6[%c0_12, %c0_13] : memref<128x16xf32, #tpu.memory_space<vmem>>, vector<128x16xf32>
    tpu.vector_store %arg6[%c0_12, %c0_13], %17 {strides = array<i32>} : memref<128x16xf32, #tpu.memory_space<vmem>>, vector<128x16xf32>,
    return
  }
  func.func @transform_0(%arg0: i32) -> (i32, i32) {
    %c0_i32 = arith.constant 0 : i32
    %c0_i32_0 = arith.constant 0 : i32
    return %arg0, %c0_i32 : i32, i32
  }
  func.func @transform_1(%arg0: i32) -> (i32, i32) {
    %c0_i32 = arith.constant 0 : i32
    %c0_i32_0 = arith.constant 0 : i32
    %c0_i32_1 = arith.constant 0 : i32
    return %c0_i32, %c0_i32_0 : i32, i32
  }
  func.func @transform_2(%arg0: i32) -> (i32, i32) {
    %c0_i32 = arith.constant 0 : i32
    %c0_i32_0 = arith.constant 0 : i32
    %c0_i32_1 = arith.constant 0 : i32
    return %c0_i32, %c0_i32_0 : i32, i32
  }
  func.func @transform_3(%arg0: i32) -> (i32, i32) {
    %c0_i32 = arith.constant 0 : i32
    %c0_i32_0 = arith.constant 0 : i32
    %c0_i32_1 = arith.constant 0 : i32
    return %c0_i32, %c0_i32_0 : i32, i32
  }
  func.func @transform_4(%arg0: i32) -> (i32, i32) {
    %c0_i32 = arith.constant 0 : i32
    %c0_i32_0 = arith.constant 0 : i32
    %c0_i32_1 = arith.constant 0 : i32
    return %c0_i32, %c0_i32_0 : i32, i32
  }
  func.func @transform_5(%arg0: i32) -> (i32, i32) {
    %c0_i32 = arith.constant 0 : i32
    %c0_i32_0 = arith.constant 0 : i32
    return %arg0, %c0_i32 : i32, i32
  }
}

</mosaic_0001>

<llo_original>
// kernel: tpu_custom_call.1
$region0: #{tpu_custom_call.1}
  #allocation0 [shape = 'u32[]', space=smem, size = 0x4, offset = 0x4, fixed_abs, tag = 'smem constant byte address 0x4 - core index']
  #allocation1 [shape = 'u32[72,128]{1,0:T(1,128)}', space=vmem, size = 0x9000, scoped, tag = 'internal scratch']
  %s0 = inlined_call_operand.vmem [shape: f32[256,32], index: 0, kind: input, shape index: {}]
  %s1 = inlined_call_operand.vmem [shape: f32[32,128], index: 1, kind: input, shape index: {}]
  %s2 = inlined_call_operand.vmem [shape: f32[1,128], index: 2, kind: input, shape index: {}]
  %s3 = inlined_call_operand.vmem [shape: f32[128,16], index: 3, kind: input, shape index: {}]
  %s4 = inlined_call_operand.vmem [shape: f32[1,16], index: 4, kind: input, shape index: {}]
  %s5 = inlined_call_operand.vmem [shape: f32[256,16], index: 5, kind: output, shape index: {}]
  %s6 = sld [smem:[#allocation0]]
  $region53: #{tpu_custom_call.1} parent=0
    _
  %s8 = ssub.s32 1, %s6
  %s9 = scalar_select 0, %s8, %s6
  loop: start=0, step=1, limit=4
  $region2: #{tpu_custom_call.1} parent=0 // loop_pre_header
    _
  $region3: #{tpu_custom_call.1} parent=0 // loop_header
    %s11 = sphi 0, %s15
    %p12 = scmp.ge.s32.totalorder %s11, 4
    %s21 = sphi 0, %s23
    %s24 = sphi 0, %s21
    %s25 = sphi 0, %s24
    %s41 = sphi 0, %s25
    %s45 = sphi 0, %s45
    %s47 = sphi 0, %s45
    %s48 = sphi 0, %s47
    %s62 = sphi 0, %s48
    %s66 = sphi 0, %s66
    %s68 = sphi 0, %s66
    %s69 = sphi 0, %s68
    %s83 = sphi 0, %s69
    %s87 = sphi 0, %s87
    %s89 = sphi 0, %s87
    %s90 = sphi 0, %s89
    %s104 = sphi 0, %s90
    %s108 = sphi 0, %s108
    %s110 = sphi 0, %s108
    %s111 = sphi 0, %s110
    %s125 = sphi 0, %s111
    %s131 = sphi 0, %s133
    %s134 = sphi 0, %s131
    %s135 = sphi 0, %s134
    %s151 = sphi 0, %s135
  $region4: #{tpu_custom_call.1} parent=0 // loop_header_branch
    %14 = sbr.rel (%p12) target = $region8
  $region5: #{tpu_custom_call.1} parent=0 // loop_body
    %s16 = ssub.s32 %s11, 1
    %s17 = ssub.s32 %s11, 2
    %s18 = sadd.s32 %s11, 1
    %s19 = ssub.s32 %s11, %s18
    %p20 = scmp.eq.s32.totalorder %s19, 0
    %s22 = sadd.s32 %s21, 1
    %s23 = scalar_select %p20, %s21, %s22
    %p26 = pneg %p20
    %p27 = scmp.eq.s32.totalorder %s11, 1
    %p28 = por %p26, %p27
    %p29 = scmp.ne.s32.totalorder %s21, %s24
    %p30 = scmp.eq.s32.totalorder %s11, 0
    %p31 = por %p29, %p30
    %p32 = scmp.ne.s32.totalorder %s21, %s24
    %p33 = scmp.eq.s32.totalorder %s16, 1
    %p34 = por %p32, %p33
    %p35 = scmp.ne.s32.totalorder %s24, %s25
    %p36 = scmp.eq.s32.totalorder %s16, 0
    %p37 = por %p35, %p36
    %p38 = scmp.ne.s32.totalorder %s24, %s25
    %p39 = scmp.eq.s32.totalorder %s17, 1
    %p40 = por %p38, %p39
    %p42 = scmp.ne.s32.totalorder %s25, %s41
    %p43 = scmp.eq.s32.totalorder %s17, 0
    %p44 = por %p42, %p43
    %s46 = sadd.s32 %s45, 1
    %p49 = scmp.eq.s32.totalorder %s11, 1
    %p50 = scmp.ne.s32.totalorder %s45, %s47
    %p51 = scmp.eq.s32.totalorder %s11, 0
    %p52 = por %p50, %p51
    %p53 = scmp.ne.s32.totalorder %s45, %s47
    %p54 = scmp.eq.s32.totalorder %s16, 1
    %p55 = por %p53, %p54
    %p56 = scmp.ne.s32.totalorder %s47, %s48
    %p57 = scmp.eq.s32.totalorder %s16, 0
    %p58 = por %p56, %p57
    %p59 = scmp.ne.s32.totalorder %s47, %s48
    %p60 = scmp.eq.s32.totalorder %s17, 1
    %p61 = por %p59, %p60
    %p63 = scmp.ne.s32.totalorder %s48, %s62
    %p64 = scmp.eq.s32.totalorder %s17, 0
    %p65 = por %p63, %p64
    %s67 = sadd.s32 %s66, 1
    %p70 = scmp.eq.s32.totalorder %s11, 1
    %p71 = scmp.ne.s32.totalorder %s66, %s68
    %p72 = scmp.eq.s32.totalorder %s11, 0
    %p73 = por %p71, %p72
    %p74 = scmp.ne.s32.totalorder %s66, %s68
    %p75 = scmp.eq.s32.totalorder %s16, 1
    %p76 = por %p74, %p75
    %p77 = scmp.ne.s32.totalorder %s68, %s69
    %p78 = scmp.eq.s32.totalorder %s16, 0
    %p79 = por %p77, %p78
    %p80 = scmp.ne.s32.totalorder %s68, %s69
    %p81 = scmp.eq.s32.totalorder %s17, 1
    %p82 = por %p80, %p81
    %p84 = scmp.ne.s32.totalorder %s69, %s83
    %p85 = scmp.eq.s32.totalorder %s17, 0
    %p86 = por %p84, %p85
    %s88 = sadd.s32 %s87, 1
    %p91 = scmp.eq.s32.totalorder %s11, 1
    %p92 = scmp.ne.s32.totalorder %s87, %s89
    %p93 = scmp.eq.s32.totalorder %s11, 0
    %p94 = por %p92, %p93
    %p95 = scmp.ne.s32.totalorder %s87, %s89
    %p96 = scmp.eq.s32.totalorder %s16, 1
    %p97 = por %p95, %p96
    %p98 = scmp.ne.s32.totalorder %s89, %s90
    %p99 = scmp.eq.s32.totalorder %s16, 0
    %p100 = por %p98, %p99
    %p101 = scmp.ne.s32.totalorder %s89, %s90
    %p102 = scmp.eq.s32.totalorder %s17, 1
    %p103 = por %p101, %p102
    %p105 = scmp.ne.s32.totalorder %s90, %s104
    %p106 = scmp.eq.s32.totalorder %s17, 0
    %p107 = por %p105, %p106
    %s109 = sadd.s32 %s108, 1
    %p112 = scmp.eq.s32.totalorder %s11, 1
    %p113 = scmp.ne.s32.totalorder %s108, %s110
    %p114 = scmp.eq.s32.totalorder %s11, 0
    %p115 = por %p113, %p114
    %p116 = scmp.ne.s32.totalorder %s108, %s110
    %p117 = scmp.eq.s32.totalorder %s16, 1
    %p118 = por %p116, %p117
    %p119 = scmp.ne.s32.totalorder %s110, %s111
    %p120 = scmp.eq.s32.totalorder %s16, 0
    %p121 = por %p119, %p120
    %p122 = scmp.ne.s32.totalorder %s110, %s111
    %p123 = scmp.eq.s32.totalorder %s17, 1
    %p124 = por %p122, %p123
    %p126 = scmp.ne.s32.totalorder %s111, %s125
    %p127 = scmp.eq.s32.totalorder %s17, 0
    %p128 = por %p126, %p127
    %s129 = ssub.s32 %s11, %s18
    %p130 = scmp.eq.s32.totalorder %s129, 0
    %s132 = sadd.s32 %s131, 1
    %s133 = scalar_select %p130, %s131, %s132
    %p136 = pneg %p130
    %p137 = scmp.eq.s32.totalorder %s11, 1
    %p138 = por %p136, %p137
    %p139 = scmp.ne.s32.totalorder %s131, %s134
    %p140 = scmp.eq.s32.totalorder %s11, 0
    %p141 = por %p139, %p140
    %p142 = scmp.ne.s32.totalorder %s131, %s134
    %p143 = scmp.eq.s32.totalorder %s16, 1
    %p144 = por %p142, %p143
    %p145 = scmp.ne.s32.totalorder %s134, %s135
    %p146 = scmp.eq.s32.totalorder %s16, 0
    %p147 = por %p145, %p146
    %p148 = scmp.ne.s32.totalorder %s134, %s135
    %p149 = scmp.eq.s32.totalorder %s17, 1
    %p150 = por %p148, %p149
    %p152 = scmp.ne.s32.totalorder %s135, %s151
    %p153 = scmp.eq.s32.totalorder %s17, 0
    %p154 = por %p152, %p153
    %p155 = scmp.le.s32.totalorder 1, %s11
    %p156 = scmp.lt.s32.totalorder %s11, 3
    %p157 = pnand %p155, %p156
    %p158 = pneg %p157
    // Predicated region
    $region9: #{tpu_custom_call.1} parent=5 // pred_check
      _
    $region10: #{tpu_custom_call.1} parent=5 // pred_check_branch
      %160 = sbr.rel (%p157) target = $region12
    $region11: #{tpu_custom_call.1} parent=5 // pred_region
      %s161 = ssub.s32 %s11, 1
      // Predicated region
      $region13: #{tpu_custom_call.1} parent=11 // pred_check
        %p162 = pneg %p58
      $region14: #{tpu_custom_call.1} parent=11 // pred_check_branch
        %164 = sbr.rel (%p162) target = $region16
      $region15: #{tpu_custom_call.1} parent=11 // pred_region
        _
      $region16: #{tpu_custom_call.1} parent=11 // pred_fallthru
        _
      // Predicated region
      $region17: #{tpu_custom_call.1} parent=11 // pred_check
        %p165 = pneg %p79
      $region18: #{tpu_custom_call.1} parent=11 // pred_check_branch
        %167 = sbr.rel (%p165) target = $region20
      $region19: #{tpu_custom_call.1} parent=11 // pred_region
        _
      $region20: #{tpu_custom_call.1} parent=11 // pred_fallthru
        _
      // Predicated region
      $region21: #{tpu_custom_call.1} parent=11 // pred_check
        %p168 = pneg %p100
      $region22: #{tpu_custom_call.1} parent=11 // pred_check_branch
        %170 = sbr.rel (%p168) target = $region24
      $region23: #{tpu_custom_call.1} parent=11 // pred_region
        _
      $region24: #{tpu_custom_call.1} parent=11 // pred_fallthru
        _
      // Predicated region
      $region25: #{tpu_custom_call.1} parent=11 // pred_check
        %p171 = pneg %p121
      $region26: #{tpu_custom_call.1} parent=11 // pred_check_branch
        %173 = sbr.rel (%p171) target = $region28
      $region27: #{tpu_custom_call.1} parent=11 // pred_region
        _
      $region28: #{tpu_custom_call.1} parent=11 // pred_fallthru
        _
    $region12: #{tpu_custom_call.1} parent=5 // pred_fallthru
      _
    %p174 = scmp.lt.s32.totalorder %s11, 2
    // Predicated region
    $region29: #{tpu_custom_call.1} parent=5 // pred_check
      %p175 = pneg %p174
    $region30: #{tpu_custom_call.1} parent=5 // pred_check_branch
      %177 = sbr.rel (%p175) target = $region32
    $region31: #{tpu_custom_call.1} parent=5 // pred_region
      // Predicated region
      $region33: #{tpu_custom_call.1} parent=31 // pred_check
        %p178 = pneg %p31
      $region34: #{tpu_custom_call.1} parent=31 // pred_check_branch
        %180 = sbr.rel (%p178) target = $region36
      $region35: #{tpu_custom_call.1} parent=31 // pred_region
        %s181 = smul.u32 16, %s11
        %p182 = scmp.lt.s32.totalorder %s181, 31
        %s183 = scalar_select %p182, %s181, 31
        %s184 = smul.addr %s183, 8
        %s185 = scalar_lea.vmem %s0, %s184
        %s186 = smul.u32 16, %s11
      $region36: #{tpu_custom_call.1} parent=31 // pred_fallthru
        _
    $region32: #{tpu_custom_call.1} parent=5 // pred_fallthru
      _
    %p187 = scmp.le.s32.totalorder 1, %s11
    %p188 = scmp.lt.s32.totalorder %s11, 3
    %p189 = pnand %p187, %p188
    %p190 = pneg %p189
    // Predicated region
    $region37: #{tpu_custom_call.1} parent=5 // pred_check
      _
    $region38: #{tpu_custom_call.1} parent=5 // pred_check_branch
      %192 = sbr.rel (%p189) target = $region40
    $region39: #{tpu_custom_call.1} parent=5 // pred_region
      %s193 = ssub.s32 %s11, 1
      %s194 = smul.u32 16, %s16
      %p195 = scmp.lt.s32.totalorder %s194, 31
      %s196 = scalar_select %p195, %s194, 31
      %s197 = smul.addr %s196, 8
      %s198 = scalar_lea.vmem %s0, %s197
      %p199 = pneg %p37
      %p200 = pneg %p34
      %p201 = pneg %p58
      %p202 = pneg %p55
      %p203 = pneg %p79
      %p204 = pneg %p76
      %p205 = pneg %p100
      %p206 = pneg %p97
      %p207 = pneg %p121
      %p208 = pneg %p118
      %p209 = pneg %p147
      %p210 = pneg %p144
      %s211 = smul.u32 16, %s16
      %p212 = scmp.lt.s32.totalorder %s211, 31
      %s213 = scalar_select %p212, %s211, 31
      %s214 = smul.addr %s213, 8
      %s215 = scalar_lea.vmem %s5, %s214
      %s216 = smul.u32 16, %s16
      %p217 = scmp.lt.s32.totalorder %s216, 31
      %s218 = scalar_select %p217, %s216, 31
      %s219 = smul.addr %s218, 8
      %s220 = scalar_lea.vmem %s0, %s219
      %s221 = smul.u32 16, %s16
      %s222 = smul.u32 16, %s16
      %p223 = scmp.lt.s32.totalorder %s222, 31
      %s224 = scalar_select %p223, %s222, 31
      %s225 = smul.addr %s224, 8
      %s226 = scalar_lea.vmem %s5, %s225
      %s227 = smul.u32 16, %s16
      %v228 = vld [vmem:[%s220] sm:$0xff]
      %v229 = vld [vmem:[%s220 + $0x8] sm:$0xff]
      %v230 = vld [vmem:[%s220 + $0x10] sm:$0xff]
      %v231 = vld [vmem:[%s220 + $0x18] sm:$0xff]
      %v232 = vld [vmem:[%s220 + $0x20] sm:$0xff]
      %v233 = vld [vmem:[%s220 + $0x28] sm:$0xff]
      %v234 = vld [vmem:[%s220 + $0x30] sm:$0xff]
      %v235 = vld [vmem:[%s220 + $0x38] sm:$0xff]
      %v236 = vld [vmem:[%s220 + $0x40] sm:$0xff]
      %v237 = vld [vmem:[%s220 + $0x48] sm:$0xff]
      %v238 = vld [vmem:[%s220 + $0x50] sm:$0xff]
      %v239 = vld [vmem:[%s220 + $0x58] sm:$0xff]
      %v240 = vld [vmem:[%s220 + $0x60] sm:$0xff]
      %v241 = vld [vmem:[%s220 + $0x68] sm:$0xff]
      %v242 = vld [vmem:[%s220 + $0x70] sm:$0xff]
      %v243 = vld [vmem:[%s220 + $0x78] sm:$0xff]
      %v244 = vld [vmem:[%s1] sm:$0xff]
      %v245 = vld [vmem:[%s1 + $0x8] sm:$0xff]
      %v246 = vld [vmem:[%s1 + $0x10] sm:$0xff]
      %v247 = vld [vmem:[%s1 + $0x18] sm:$0xff]
      %v248 = vld [vmem:[%s2] sm:$0x1]
      %v250 = vperm.slane %v248, 0
      %vm252 = vcmask 261120
      %v254 = vsel %vm252, %v228, 0
      %v257 = vsel %vm252, %v229, 0
      %v260 = vsel %vm252, %v230, 0
      %v263 = vsel %vm252, %v231, 0
      %v266 = vsel %vm252, %v232, 0
      %v269 = vsel %vm252, %v233, 0
      %v272 = vsel %vm252, %v234, 0
      %v275 = vsel %vm252, %v235, 0
      %v278 = vsel %vm252, %v236, 0
      %v281 = vsel %vm252, %v237, 0
      %v284 = vsel %vm252, %v238, 0
      %v287 = vsel %vm252, %v239, 0
      %v290 = vsel %vm252, %v240, 0
      %v293 = vsel %vm252, %v241, 0
      %v296 = vsel %vm252, %v242, 0
      %v299 = vsel %vm252, %v243, 0
      %301 = vmatpush.msra.mxu0 0.0
      %302 = vmatpush.msra.mxu0 0.0
      %303 = vmatpush.msra.mxu0 0.0
      %304 = vmatpush.msra.mxu0 0.0
      %305 = vmatpush.msra.mxu0 0.0
      %306 = vmatpush.msra.mxu0 0.0
      %307 = vmatpush.msra.mxu0 0.0
      %308 = vmatpush.msra.mxu0 0.0
      %309 = vmatpush.msra.mxu0 0.0
      %310 = vmatpush.msra.mxu0 0.0
      %311 = vmatpush.msra.mxu0 0.0
      %312 = vmatpush.msra.mxu0 0.0
      %313 = vmatpush.msra.mxu0 %v247
      %314 = vmatpush.msra.mxu0 %v246
      %315 = vmatpush.msra.mxu0 %v245
      %316 = vmatpush.msra.mxu0 %v244
      %317 = vmatmul.f32.gmra.mxu0 %v254
      %v318 = vpop.f32.mrf.mxu0
      %v319 = vadd.f32 %v250, %v318
      %320 = vmatmul.f32.gmra.mxu0 %v257
      %v321 = vpop.f32.mrf.mxu0
      %v322 = vadd.f32 %v250, %v321
      %323 = vmatmul.f32.gmra.mxu0 %v260
      %v324 = vpop.f32.mrf.mxu0
      %v325 = vadd.f32 %v250, %v324
      %326 = vmatmul.f32.gmra.mxu0 %v263
      %v327 = vpop.f32.mrf.mxu0
      %v328 = vadd.f32 %v250, %v327
      %329 = vmatmul.f32.gmra.mxu0 %v266
      %v330 = vpop.f32.mrf.mxu0
      %v331 = vadd.f32 %v250, %v330
      %332 = vmatmul.f32.gmra.mxu0 %v269
      %v333 = vpop.f32.mrf.mxu0
      %v334 = vadd.f32 %v250, %v333
      %335 = vmatmul.f32.gmra.mxu0 %v272
      %v336 = vpop.f32.mrf.mxu0
      %v337 = vadd.f32 %v250, %v336
      %338 = vmatmul.f32.gmra.mxu0 %v275
      %v339 = vpop.f32.mrf.mxu0
      %v340 = vadd.f32 %v250, %v339
      %341 = vmatmul.f32.gmra.mxu0 %v278
      %v342 = vpop.f32.mrf.mxu0
      %v343 = vadd.f32 %v250, %v342
      %344 = vmatmul.f32.gmra.mxu0 %v281
      %v345 = vpop.f32.mrf.mxu0
      %v346 = vadd.f32 %v250, %v345
      %347 = vmatmul.f32.gmra.mxu0 %v284
      %v348 = vpop.f32.mrf.mxu0
      %v349 = vadd.f32 %v250, %v348
      %350 = vmatmul.f32.gmra.mxu0 %v287
      %v351 = vpop.f32.mrf.mxu0
      %v352 = vadd.f32 %v250, %v351
      %353 = vmatmul.f32.gmra.mxu0 %v290
      %v354 = vpop.f32.mrf.mxu0
      %v355 = vadd.f32 %v250, %v354
      %356 = vmatmul.f32.gmra.mxu0 %v293
      %v357 = vpop.f32.mrf.mxu0
      %v358 = vadd.f32 %v250, %v357
      %359 = vmatmul.f32.gmra.mxu0 %v296
      %v360 = vpop.f32.mrf.mxu0
      %v361 = vadd.f32 %v250, %v360
      %362 = vmatmul.f32.gmra.mxu0 %v299
      %v363 = vpop.f32.mrf.mxu0
      %v364 = vadd.f32 %v250, %v363
      %365 = vdwg.mxu0
      %v366 = vmax.f32 %v319, 0.0
      %v367 = vmax.f32 %v322, 0.0
      %v368 = vmax.f32 %v325, 0.0
      %v369 = vmax.f32 %v328, 0.0
      %v370 = vmax.f32 %v331, 0.0
      %v371 = vmax.f32 %v334, 0.0
      %v372 = vmax.f32 %v337, 0.0
      %v373 = vmax.f32 %v340, 0.0
      %v374 = vmax.f32 %v343, 0.0
      %v375 = vmax.f32 %v346, 0.0
      %v376 = vmax.f32 %v349, 0.0
      %v377 = vmax.f32 %v352, 0.0
      %v378 = vmax.f32 %v355, 0.0
      %v379 = vmax.f32 %v358, 0.0
      %v380 = vmax.f32 %v361, 0.0
      %v381 = vmax.f32 %v364, 0.0
      %v382 = vld [vmem:[%s3] sm:$0xff]
      %v383 = vld [vmem:[%s3 + $0x8] sm:$0xff]
      %v384 = vld [vmem:[%s3 + $0x10] sm:$0xff]
      %v385 = vld [vmem:[%s3 + $0x18] sm:$0xff]
      %v386 = vld [vmem:[%s3 + $0x20] sm:$0xff]
      %v387 = vld [vmem:[%s3 + $0x28] sm:$0xff]
      %v388 = vld [vmem:[%s3 + $0x30] sm:$0xff]
      %v389 = vld [vmem:[%s3 + $0x38] sm:$0xff]
      %v390 = vld [vmem:[%s3 + $0x40] sm:$0xff]
      %v391 = vld [vmem:[%s3 + $0x48] sm:$0xff]
      %v392 = vld [vmem:[%s3 + $0x50] sm:$0xff]
      %v393 = vld [vmem:[%s3 + $0x58] sm:$0xff]
      %v394 = vld [vmem:[%s3 + $0x60] sm:$0xff]
      %v395 = vld [vmem:[%s3 + $0x68] sm:$0xff]
      %v396 = vld [vmem:[%s3 + $0x70] sm:$0xff]
      %v397 = vld [vmem:[%s3 + $0x78] sm:$0xff]
      %v398 = vld [vmem:[%s4] sm:$0x1]
      %v400 = vperm.slane %v398, 0
      %402 = vmatpush.msra.mxu0 %v397
      %403 = vmatpush.msra.mxu0 %v396
      %404 = vmatpush.msra.mxu0 %v395
      %405 = vmatpush.msra.mxu0 %v394
      %406 = vmatpush.msra.mxu0 %v393
      %407 = vmatpush.msra.mxu0 %v392
      %408 = vmatpush.msra.mxu0 %v391
      %409 = vmatpush.msra.mxu0 %v390
      %410 = vmatpush.msra.mxu0 %v389
      %411 = vmatpush.msra.mxu0 %v388
      %412 = vmatpush.msra.mxu0 %v387
      %413 = vmatpush.msra.mxu0 %v386
      %414 = vmatpush.msra.mxu0 %v385
      %415 = vmatpush.msra.mxu0 %v384
      %416 = vmatpush.msra.mxu0 %v383
      %417 = vmatpush.msra.mxu0 %v382
      %418 = vmatmul.f32.gmra.mxu0 %v366
      %v419 = vpop.f32.mrf.mxu0
      %v420 = vadd.f32 %v400, %v419
      %421 = vmatmul.f32.gmra.mxu0 %v367
      %v422 = vpop.f32.mrf.mxu0
      %v423 = vadd.f32 %v400, %v422
      %424 = vmatmul.f32.gmra.mxu0 %v368
      %v425 = vpop.f32.mrf.mxu0
      %v426 = vadd.f32 %v400, %v425
      %427 = vmatmul.f32.gmra.mxu0 %v369
      %v428 = vpop.f32.mrf.mxu0
      %v429 = vadd.f32 %v400, %v428
      %430 = vmatmul.f32.gmra.mxu0 %v370
      %v431 = vpop.f32.mrf.mxu0
      %v432 = vadd.f32 %v400, %v431
      %433 = vmatmul.f32.gmra.mxu0 %v371
      %v434 = vpop.f32.mrf.mxu0
      %v435 = vadd.f32 %v400, %v434
      %436 = vmatmul.f32.gmra.mxu0 %v372
      %v437 = vpop.f32.mrf.mxu0
      %v438 = vadd.f32 %v400, %v437
      %439 = vmatmul.f32.gmra.mxu0 %v373
      %v440 = vpop.f32.mrf.mxu0
      %v441 = vadd.f32 %v400, %v440
      %442 = vmatmul.f32.gmra.mxu0 %v374
      %v443 = vpop.f32.mrf.mxu0
      %v444 = vadd.f32 %v400, %v443
      %445 = vmatmul.f32.gmra.mxu0 %v375
      %v446 = vpop.f32.mrf.mxu0
      %v447 = vadd.f32 %v400, %v446
      %448 = vmatmul.f32.gmra.mxu0 %v376
      %v449 = vpop.f32.mrf.mxu0
      %v450 = vadd.f32 %v400, %v449
      %451 = vmatmul.f32.gmra.mxu0 %v377
      %v452 = vpop.f32.mrf.mxu0
      %v453 = vadd.f32 %v400, %v452
      %454 = vmatmul.f32.gmra.mxu0 %v378
      %v455 = vpop.f32.mrf.mxu0
      %v456 = vadd.f32 %v400, %v455
      %457 = vmatmul.f32.gmra.mxu0 %v379
      %v458 = vpop.f32.mrf.mxu0
      %v459 = vadd.f32 %v400, %v458
      %460 = vmatmul.f32.gmra.mxu0 %v380
      %v461 = vpop.f32.mrf.mxu0
      %v462 = vadd.f32 %v400, %v461
      %463 = vmatmul.f32.gmra.mxu0 %v381
      %v464 = vpop.f32.mrf.mxu0
      %v465 = vadd.f32 %v400, %v464
      %466 = vdwg.mxu0
      %v467 = vxor.u32 %v420, 2147483648
      %v468 = vxor.u32 %v423, 2147483648
      %v469 = vxor.u32 %v426, 2147483648
      %v470 = vxor.u32 %v429, 2147483648
      %v471 = vxor.u32 %v432, 2147483648
      %v472 = vxor.u32 %v435, 2147483648
      %v473 = vxor.u32 %v438, 2147483648
      %v474 = vxor.u32 %v441, 2147483648
      %v475 = vxor.u32 %v444, 2147483648
      %v476 = vxor.u32 %v447, 2147483648
      %v477 = vxor.u32 %v450, 2147483648
      %v478 = vxor.u32 %v453, 2147483648
      %v479 = vxor.u32 %v456, 2147483648
      %v480 = vxor.u32 %v459, 2147483648
      %v481 = vxor.u32 %v462, 2147483648
      %v482 = vxor.u32 %v465, 2147483648
      %v483 = vmul.f32 %v467, 1.442695
      %v484 = vpow.pop %v483
      %v485 = vmul.f32 %v468, 1.442695
      %v486 = vpow.pop %v485
      %v487 = vmul.f32 %v469, 1.442695
      %v488 = vpow.pop %v487
      %v489 = vmul.f32 %v470, 1.442695
      %v490 = vpow.pop %v489
      %v491 = vmul.f32 %v471, 1.442695
      %v492 = vpow.pop %v491
      %v493 = vmul.f32 %v472, 1.442695
      %v494 = vpow.pop %v493
      %v495 = vmul.f32 %v473, 1.442695
      %v496 = vpow.pop %v495
      %v497 = vmul.f32 %v474, 1.442695
      %v498 = vpow.pop %v497
      %v499 = vmul.f32 %v475, 1.442695
      %v500 = vpow.pop %v499
      %v501 = vmul.f32 %v476, 1.442695
      %v502 = vpow.pop %v501
      %v503 = vmul.f32 %v477, 1.442695
      %v504 = vpow.pop %v503
      %v505 = vmul.f32 %v478, 1.442695
      %v506 = vpow.pop %v505
      %v507 = vmul.f32 %v479, 1.442695
      %v508 = vpow.pop %v507
      %v509 = vmul.f32 %v480, 1.442695
      %v510 = vpow.pop %v509
      %v511 = vmul.f32 %v481, 1.442695
      %v512 = vpow.pop %v511
      %v513 = vmul.f32 %v482, 1.442695
      %v514 = vpow.pop %v513
      %v515 = vadd.f32 %v484, 1.0
      %v516 = vadd.f32 %v486, 1.0
      %v517 = vadd.f32 %v488, 1.0
      %v518 = vadd.f32 %v490, 1.0
      %v519 = vadd.f32 %v492, 1.0
      %v520 = vadd.f32 %v494, 1.0
      %v521 = vadd.f32 %v496, 1.0
      %v522 = vadd.f32 %v498, 1.0
      %v523 = vadd.f32 %v500, 1.0
      %v524 = vadd.f32 %v502, 1.0
      %v525 = vadd.f32 %v504, 1.0
      %v526 = vadd.f32 %v506, 1.0
      %v527 = vadd.f32 %v508, 1.0
      %v528 = vadd.f32 %v510, 1.0
      %v529 = vadd.f32 %v512, 1.0
      %v530 = vadd.f32 %v514, 1.0
      %v531 = vrcp.pop %v515
      %v532 = vmul.f32 %v515, %v531
      %v533 = vsub.f32 1.0, %v532
      %v534 = vmul.f32 %v531, %v533
      %v535 = vadd.f32 %v531, %v534
      %vm536 = vweird.f32 %v515
      %vm537 = vweird.f32 %v531
      %vm538 = vmor %vm536, %vm537
      %v539 = vsel %vm538, %v531, %v535
      %v540 = vand.u32 2147483647, %v515
      %vm541 = vcmp.eq.f32.partialorder %v540, 8.507059e+37
      %v542 = vand.u32 %v515, 2147483648
      %v543 = vor.u32 1.1754944e-38, %v542
      %v544 = vsel %vm541, %v543, %v539
      %v545 = vmul.f32 1.0, %v544
      %v546 = vrcp.pop %v516
      %v547 = vmul.f32 %v516, %v546
      %v548 = vsub.f32 1.0, %v547
      %v549 = vmul.f32 %v546, %v548
      %v550 = vadd.f32 %v546, %v549
      %vm551 = vweird.f32 %v516
      %vm552 = vweird.f32 %v546
      %vm553 = vmor %vm551, %vm552
      %v554 = vsel %vm553, %v546, %v550
      %v555 = vand.u32 2147483647, %v516
      %vm556 = vcmp.eq.f32.partialorder %v555, 8.507059e+37
      %v557 = vand.u32 %v516, 2147483648
      %v558 = vor.u32 1.1754944e-38, %v557
      %v559 = vsel %vm556, %v558, %v554
      %v560 = vmul.f32 1.0, %v559
      %v561 = vrcp.pop %v517
      %v562 = vmul.f32 %v517, %v561
      %v563 = vsub.f32 1.0, %v562
      %v564 = vmul.f32 %v561, %v563
      %v565 = vadd.f32 %v561, %v564
      %vm566 = vweird.f32 %v517
      %vm567 = vweird.f32 %v561
      %vm568 = vmor %vm566, %vm567
      %v569 = vsel %vm568, %v561, %v565
      %v570 = vand.u32 2147483647, %v517
      %vm571 = vcmp.eq.f32.partialorder %v570, 8.507059e+37
      %v572 = vand.u32 %v517, 2147483648
      %v573 = vor.u32 1.1754944e-38, %v572
      %v574 = vsel %vm571, %v573, %v569
      %v575 = vmul.f32 1.0, %v574
      %v576 = vrcp.pop %v518
      %v577 = vmul.f32 %v518, %v576
      %v578 = vsub.f32 1.0, %v577
      %v579 = vmul.f32 %v576, %v578
      %v580 = vadd.f32 %v576, %v579
      %vm581 = vweird.f32 %v518
      %vm582 = vweird.f32 %v576
      %vm583 = vmor %vm581, %vm582
      %v584 = vsel %vm583, %v576, %v580
      %v585 = vand.u32 2147483647, %v518
      %vm586 = vcmp.eq.f32.partialorder %v585, 8.507059e+37
      %v587 = vand.u32 %v518, 2147483648
      %v588 = vor.u32 1.1754944e-38, %v587
      %v589 = vsel %vm586, %v588, %v584
      %v590 = vmul.f32 1.0, %v589
      %v591 = vrcp.pop %v519
      %v592 = vmul.f32 %v519, %v591
      %v593 = vsub.f32 1.0, %v592
      %v594 = vmul.f32 %v591, %v593
      %v595 = vadd.f32 %v591, %v594
      %vm596 = vweird.f32 %v519
      %vm597 = vweird.f32 %v591
      %vm598 = vmor %vm596, %vm597
      %v599 = vsel %vm598, %v591, %v595
      %v600 = vand.u32 2147483647, %v519
      %vm601 = vcmp.eq.f32.partialorder %v600, 8.507059e+37
      %v602 = vand.u32 %v519, 2147483648
      %v603 = vor.u32 1.1754944e-38, %v602
      %v604 = vsel %vm601, %v603, %v599
      %v605 = vmul.f32 1.0, %v604
      %v606 = vrcp.pop %v520
      %v607 = vmul.f32 %v520, %v606
      %v608 = vsub.f32 1.0, %v607
      %v609 = vmul.f32 %v606, %v608
      %v610 = vadd.f32 %v606, %v609
      %vm611 = vweird.f32 %v520
      %vm612 = vweird.f32 %v606
      %vm613 = vmor %vm611, %vm612
      %v614 = vsel %vm613, %v606, %v610
      %v615 = vand.u32 2147483647, %v520
      %vm616 = vcmp.eq.f32.partialorder %v615, 8.507059e+37
      %v617 = vand.u32 %v520, 2147483648
      %v618 = vor.u32 1.1754944e-38, %v617
      %v619 = vsel %vm616, %v618, %v614
      %v620 = vmul.f32 1.0, %v619
      %v621 = vrcp.pop %v521
      %v622 = vmul.f32 %v521, %v621
      %v623 = vsub.f32 1.0, %v622
      %v624 = vmul.f32 %v621, %v623
      %v625 = vadd.f32 %v621, %v624
      %vm626 = vweird.f32 %v521
      %vm627 = vweird.f32 %v621
      %vm628 = vmor %vm626, %vm627
      %v629 = vsel %vm628, %v621, %v625
      %v630 = vand.u32 2147483647, %v521
      %vm631 = vcmp.eq.f32.partialorder %v630, 8.507059e+37
      %v632 = vand.u32 %v521, 2147483648
      %v633 = vor.u32 1.1754944e-38, %v632
      %v634 = vsel %vm631, %v633, %v629
      %v635 = vmul.f32 1.0, %v634
      %v636 = vrcp.pop %v522
      %v637 = vmul.f32 %v522, %v636
      %v638 = vsub.f32 1.0, %v637
      %v639 = vmul.f32 %v636, %v638
      %v640 = vadd.f32 %v636, %v639
      %vm641 = vweird.f32 %v522
      %vm642 = vweird.f32 %v636
      %vm643 = vmor %vm641, %vm642
      %v644 = vsel %vm643, %v636, %v640
      %v645 = vand.u32 2147483647, %v522
      %vm646 = vcmp.eq.f32.partialorder %v645, 8.507059e+37
      %v647 = vand.u32 %v522, 2147483648
      %v648 = vor.u32 1.1754944e-38, %v647
      %v649 = vsel %vm646, %v648, %v644
      %v650 = vmul.f32 1.0, %v649
      %v651 = vrcp.pop %v523
      %v652 = vmul.f32 %v523, %v651
      %v653 = vsub.f32 1.0, %v652
      %v654 = vmul.f32 %v651, %v653
      %v655 = vadd.f32 %v651, %v654
      %vm656 = vweird.f32 %v523
      %vm657 = vweird.f32 %v651
      %vm658 = vmor %vm656, %vm657
      %v659 = vsel %vm658, %v651, %v655
      %v660 = vand.u32 2147483647, %v523
      %vm661 = vcmp.eq.f32.partialorder %v660, 8.507059e+37
      %v662 = vand.u32 %v523, 2147483648
      %v663 = vor.u32 1.1754944e-38, %v662
      %v664 = vsel %vm661, %v663, %v659
      %v665 = vmul.f32 1.0, %v664
      %v666 = vrcp.pop %v524
      %v667 = vmul.f32 %v524, %v666
      %v668 = vsub.f32 1.0, %v667
      %v669 = vmul.f32 %v666, %v668
      %v670 = vadd.f32 %v666, %v669
      %vm671 = vweird.f32 %v524
      %vm672 = vweird.f32 %v666
      %vm673 = vmor %vm671, %vm672
      %v674 = vsel %vm673, %v666, %v670
      %v675 = vand.u32 2147483647, %v524
      %vm676 = vcmp.eq.f32.partialorder %v675, 8.507059e+37
      %v677 = vand.u32 %v524, 2147483648
      %v678 = vor.u32 1.1754944e-38, %v677
      %v679 = vsel %vm676, %v678, %v674
      %v680 = vmul.f32 1.0, %v679
      %v681 = vrcp.pop %v525
      %v682 = vmul.f32 %v525, %v681
      %v683 = vsub.f32 1.0, %v682
      %v684 = vmul.f32 %v681, %v683
      %v685 = vadd.f32 %v681, %v684
      %vm686 = vweird.f32 %v525
      %vm687 = vweird.f32 %v681
      %vm688 = vmor %vm686, %vm687
      %v689 = vsel %vm688, %v681, %v685
      %v690 = vand.u32 2147483647, %v525
      %vm691 = vcmp.eq.f32.partialorder %v690, 8.507059e+37
      %v692 = vand.u32 %v525, 2147483648
      %v693 = vor.u32 1.1754944e-38, %v692
      %v694 = vsel %vm691, %v693, %v689
      %v695 = vmul.f32 1.0, %v694
      %v696 = vrcp.pop %v526
      %v697 = vmul.f32 %v526, %v696
      %v698 = vsub.f32 1.0, %v697
      %v699 = vmul.f32 %v696, %v698
      %v700 = vadd.f32 %v696, %v699
      %vm701 = vweird.f32 %v526
      %vm702 = vweird.f32 %v696
      %vm703 = vmor %vm701, %vm702
      %v704 = vsel %vm703, %v696, %v700
      %v705 = vand.u32 2147483647, %v526
      %vm706 = vcmp.eq.f32.partialorder %v705, 8.507059e+37
      %v707 = vand.u32 %v526, 2147483648
      %v708 = vor.u32 1.1754944e-38, %v707
      %v709 = vsel %vm706, %v708, %v704
      %v710 = vmul.f32 1.0, %v709
      %v711 = vrcp.pop %v527
      %v712 = vmul.f32 %v527, %v711
      %v713 = vsub.f32 1.0, %v712
      %v714 = vmul.f32 %v711, %v713
      %v715 = vadd.f32 %v711, %v714
      %vm716 = vweird.f32 %v527
      %vm717 = vweird.f32 %v711
      %vm718 = vmor %vm716, %vm717
      %v719 = vsel %vm718, %v711, %v715
      %v720 = vand.u32 2147483647, %v527
      %vm721 = vcmp.eq.f32.partialorder %v720, 8.507059e+37
      %v722 = vand.u32 %v527, 2147483648
      %v723 = vor.u32 1.1754944e-38, %v722
      %v724 = vsel %vm721, %v723, %v719
      %v725 = vmul.f32 1.0, %v724
      %v726 = vrcp.pop %v528
      %v727 = vmul.f32 %v528, %v726
      %v728 = vsub.f32 1.0, %v727
      %v729 = vmul.f32 %v726, %v728
      %v730 = vadd.f32 %v726, %v729
      %vm731 = vweird.f32 %v528
      %vm732 = vweird.f32 %v726
      %vm733 = vmor %vm731, %vm732
      %v734 = vsel %vm733, %v726, %v730
      %v735 = vand.u32 2147483647, %v528
      %vm736 = vcmp.eq.f32.partialorder %v735, 8.507059e+37
      %v737 = vand.u32 %v528, 2147483648
      %v738 = vor.u32 1.1754944e-38, %v737
      %v739 = vsel %vm736, %v738, %v734
      %v740 = vmul.f32 1.0, %v739
      %v741 = vrcp.pop %v529
      %v742 = vmul.f32 %v529, %v741
      %v743 = vsub.f32 1.0, %v742
      %v744 = vmul.f32 %v741, %v743
      %v745 = vadd.f32 %v741, %v744
      %vm746 = vweird.f32 %v529
      %vm747 = vweird.f32 %v741
      %vm748 = vmor %vm746, %vm747
      %v749 = vsel %vm748, %v741, %v745
      %v750 = vand.u32 2147483647, %v529
      %vm751 = vcmp.eq.f32.partialorder %v750, 8.507059e+37
      %v752 = vand.u32 %v529, 2147483648
      %v753 = vor.u32 1.1754944e-38, %v752
      %v754 = vsel %vm751, %v753, %v749
      %v755 = vmul.f32 1.0, %v754
      %v756 = vrcp.pop %v530
      %v757 = vmul.f32 %v530, %v756
      %v758 = vsub.f32 1.0, %v757
      %v759 = vmul.f32 %v756, %v758
      %v760 = vadd.f32 %v756, %v759
      %vm761 = vweird.f32 %v530
      %vm762 = vweird.f32 %v756
      %vm763 = vmor %vm761, %vm762
      %v764 = vsel %vm763, %v756, %v760
      %v765 = vand.u32 2147483647, %v530
      %vm766 = vcmp.eq.f32.partialorder %v765, 8.507059e+37
      %v767 = vand.u32 %v530, 2147483648
      %v768 = vor.u32 1.1754944e-38, %v767
      %v769 = vsel %vm766, %v768, %v764
      %v770 = vmul.f32 1.0, %v769
      %vm771 = vcmask 130048
      %772 = vst.msk [vmem:[%s226] sm:$0xff] %vm771, %v545
      %773 = vst.msk [vmem:[%s226 + $0x8] sm:$0xff] %vm771, %v560
      %774 = vst.msk [vmem:[%s226 + $0x10] sm:$0xff] %vm771, %v575
      %775 = vst.msk [vmem:[%s226 + $0x18] sm:$0xff] %vm771, %v590
      %776 = vst.msk [vmem:[%s226 + $0x20] sm:$0xff] %vm771, %v605
      %777 = vst.msk [vmem:[%s226 + $0x28] sm:$0xff] %vm771, %v620
      %778 = vst.msk [vmem:[%s226 + $0x30] sm:$0xff] %vm771, %v635
      %779 = vst.msk [vmem:[%s226 + $0x38] sm:$0xff] %vm771, %v650
      %780 = vst.msk [vmem:[%s226 + $0x40] sm:$0xff] %vm771, %v665
      %781 = vst.msk [vmem:[%s226 + $0x48] sm:$0xff] %vm771, %v680
      %782 = vst.msk [vmem:[%s226 + $0x50] sm:$0xff] %vm771, %v695
      %783 = vst.msk [vmem:[%s226 + $0x58] sm:$0xff] %vm771, %v710
      %784 = vst.msk [vmem:[%s226 + $0x60] sm:$0xff] %vm771, %v725
      %785 = vst.msk [vmem:[%s226 + $0x68] sm:$0xff] %vm771, %v740
      %786 = vst.msk [vmem:[%s226 + $0x70] sm:$0xff] %vm771, %v755
      %787 = vst.msk [vmem:[%s226 + $0x78] sm:$0xff] %vm771, %v770
      %s788 = smul.u32 16, %s16
      %p789 = scmp.lt.s32.totalorder %s788, 31
      %s790 = scalar_select %p789, %s788, 31
      %s791 = smul.addr %s790, 8
      %s792 = scalar_lea.vmem %s5, %s791
      // Predicated region
      $region41: #{tpu_custom_call.1} parent=39 // pred_check
        %p793 = pneg %p144
      $region42: #{tpu_custom_call.1} parent=39 // pred_check_branch
        %795 = sbr.rel (%p793) target = $region44
      $region43: #{tpu_custom_call.1} parent=39 // pred_region
        %s796 = smul.u32 16, %s16
      $region44: #{tpu_custom_call.1} parent=39 // pred_fallthru
        _
    $region40: #{tpu_custom_call.1} parent=5 // pred_fallthru
      _
    %p797 = scmp.le.s32.totalorder 2, %s11
    // Predicated region
    $region45: #{tpu_custom_call.1} parent=5 // pred_check
      %p798 = pneg %p797
    $region46: #{tpu_custom_call.1} parent=5 // pred_check_branch
      %800 = sbr.rel (%p798) target = $region48
    $region47: #{tpu_custom_call.1} parent=5 // pred_region
      %s801 = ssub.s32 %s11, 2
      // Predicated region
      $region49: #{tpu_custom_call.1} parent=47 // pred_check
        %p802 = pneg %p150
      $region50: #{tpu_custom_call.1} parent=47 // pred_check_branch
        %804 = sbr.rel (%p802) target = $region52
      $region51: #{tpu_custom_call.1} parent=47 // pred_region
        %s805 = smul.u32 16, %s17
        %p806 = scmp.lt.s32.totalorder %s805, 31
        %s807 = scalar_select %p806, %s805, 31
        %s808 = smul.addr %s807, 8
        %s809 = scalar_lea.vmem %s5, %s808
      $region52: #{tpu_custom_call.1} parent=47 // pred_fallthru
        _
    $region48: #{tpu_custom_call.1} parent=5 // pred_fallthru
      _
  $region6: #{tpu_custom_call.1} parent=0 // loop_footer
    %s15 = sadd.s32 1, %s11
  $region7: #{tpu_custom_call.1} parent=0 // loop_footer_branch
    %10 = sbr.rel target = $region3
  $region8: #{tpu_custom_call.1} parent=0 // loop_exit
    _

</llo_original>
